<compile_context>
chip_gen: v6e
topology: v6e:2x2x1
jax: 0.10.0
libtpu: 0.0.40
codegen_flags: <defaults>
</compile_context>

<pallas_src>
import functools

import jax
import jax.numpy as jnp
from jax.experimental import pallas as pl
from jax.experimental.pallas import tpu as pltpu


# ---------------------------------------------------------------------------
# Pallas kernel: lane-dense complex channel mixing over one block of modes.
#   a  : (2, B,  Ci, Mb)   retained Fourier coefficients (axis 0 = re/im)
#   w  : (2, Ci, Co, Mb)   complex weights (axis 0 = re/im)
#   out: (2, B,  Co, Mb)   out[b, o, m] = sum_i a[b, i, m] * w[i, o, m]
# Mb is a multiple of 128 (lane axis); Ci/Co are the full (small) channel dims.
# `sub` lane sub-chunks keep the accumulators in vregs (one store per chunk).
# ---------------------------------------------------------------------------
def _cmul_kernel(a_ref, w_ref, o_ref, *, sub):
    _, B, Ci, Mb = a_ref.shape
    Co = w_ref.shape[2]
    n_sub = Mb // sub
    for s in range(n_sub):                        # static slices: zero cost
        sl = slice(s * sub, (s + 1) * sub)
        ar = a_ref[0, :, :, sl]                   # (B, Ci, sub)
        ai = a_ref[1, :, :, sl]
        wr = w_ref[0, :, :, sl]                   # (Ci, Co, sub)
        wi = w_ref[1, :, :, sl]

        acc_re = jnp.zeros((B, Co, sub), jnp.float32)
        acc_im = jnp.zeros((B, Co, sub), jnp.float32)
        # Static unroll over the small input-channel dim: pure VPU
        # broadcast-FMA, fully dense along the 128-lane mode axis.
        for i in range(Ci):
            ar_i = ar[:, i:i + 1, :]              # (B, 1, sub)
            ai_i = ai[:, i:i + 1, :]
            wr_i = wr[i:i + 1, :, :]              # (1, Co, sub)
            wi_i = wi[i:i + 1, :, :]
            acc_re = acc_re + ar_i * wr_i - ai_i * wi_i
            acc_im = acc_im + ar_i * wi_i + ai_i * wr_i

        o_ref[0, :, :, sl] = acc_re
        o_ref[1, :, :, sl] = acc_im


# ---------------------------------------------------------------------------
# Block planning: per-generation VMEM budget, >= 2 grid blocks for megacore,
# vreg-resident accumulator sub-chunks, explicit vmem_limit_bytes.
# ---------------------------------------------------------------------------
def _round_up(x, m):
    return ((x + m - 1) // m) * m


def _vmem_capacity_bytes():
    try:
        return int(pltpu.get_tpu_info().vmem_capacity_bytes)
    except Exception:
        return 64 * 1024 * 1024        # conservative (v7x per-TC)


def _plan_mode_blocks(B, Ci, Co, Mtot):
    """Return (m_blk, Mpad, sub, vmem_limit_bytes)."""
    vmem_cap = _vmem_capacity_bytes()
    budget = min(int(vmem_cap * 0.45), 48 * 1024 * 1024)

    # f32 re+im streams (a, w, out) per retained mode, double-buffered.
    bytes_per_mode = (B * Ci + Ci * Co + B * Co) * 2 * 4 * 2
    cap = max(128, (budget // bytes_per_mode) // 128 * 128)

    Mpad0 = max(128, _round_up(Mtot, 128))
    # >= 2 blocks whenever there is enough work: the 'parallel' mode axis is
    # sharded across v7x's two TensorCores.
    min_blocks = 2 if Mpad0 >= 256 else 1
    n_blocks = max(min_blocks, pl.cdiv(Mpad0, cap))
    m_blk = _round_up(pl.cdiv(Mpad0, n_blocks), 128)
    Mpad = n_blocks * m_blk

    # Lane sub-chunk: keep (re, im) accumulators <= ~96 KiB so they stay
    # resident in vregs across the Ci unroll.
    acc_bytes_per_lane = 2 * B * Co * 4
    max_sub = max(128, ((96 * 1024) // acc_bytes_per_lane) // 128 * 128)
    sub = 128
    for cand in (1024, 512, 256, 128):
        if cand <= max_sub and m_blk % cand == 0:
            sub = cand
            break

    tile_bytes = bytes_per_mode * m_blk            # already double-buffered
    vmem_limit = int(min(0.9 * vmem_cap,
                         max(16 * 1024 * 1024, tile_bytes + (4 << 20))))
    return m_blk, Mpad, sub, vmem_limit


def _spectral_channel_mix(a, w, m_blk, sub, vmem_limit):
    """pallas_call: per-mode complex channel mixing, mode axis blocked."""
    _, B, Ci, Mpad = a.shape
    Co = w.shape[2]
    grid = (Mpad // m_blk,)

    return pl.pallas_call(
        functools.partial(_cmul_kernel, sub=sub),
        out_shape=jax.ShapeDtypeStruct((2, B, Co, Mpad), jnp.float32),
        grid=grid,
        in_specs=[pl.BlockSpec((2, B, Ci, m_blk), lambda m: (0, 0, 0, m)),
                  pl.BlockSpec((2, Ci, Co, m_blk), lambda m: (0, 0, 0, m))],
        out_specs=pl.BlockSpec((2, B, Co, m_blk), lambda m: (0, 0, 0, m)),
        compiler_params=pltpu.CompilerParams(
            dimension_semantics=("parallel",),     # mode blocks independent
            vmem_limit_bytes=vmem_limit),
    )(a, w)


# ---------------------------------------------------------------------------
# One-time weight pre-pack (hoisted out of the per-call path).
# ---------------------------------------------------------------------------
def pack_spectral_weights(weights1, weights2):
    """(Ci, Co, m1, m2) complex x2  ->  (2, Ci, Co, 2*m1*m2) float32."""
    Ci, Co, m1, m2 = weights1.shape
    w = jnp.concatenate([weights1, weights2], axis=2).reshape(Ci, Co, 2 * m1 * m2)
    return jnp.stack([jnp.real(w), jnp.imag(w)], axis=0).astype(jnp.float32)


# ---------------------------------------------------------------------------
# SpectralConv2d forward
# ---------------------------------------------------------------------------
def spectral_conv2d(x, weights1, weights2, modes1, modes2, out_channels,
                    packed_weights=None, use_pallas=None):
    """x: (B, Cin, H, W) float32.  Returns (B, Cout, H, W) float32."""
    B, Cin, H, W = x.shape
    Wf = W // 2 + 1
    m1, m2 = modes1, modes2
    assert 2 * m1 <= H and m2 <= Wf, "retained mode corners must not overlap"
    Mtot = 2 * m1 * m2

    if use_pallas is None:
        # Below this the fixed pallas_call + packing cost exceeds the einsum.
        use_pallas = Mtot >= 256

    # TODO(synk): rfft2/irfft2 have no Pallas TPU primitive; done in plain JAX.
    x_ft = jnp.fft.rfft2(x)                                   # (B,Cin,H,Wf) c64

    a_top = x_ft[:, :, :m1, :m2]
    a_bot = x_ft[:, :, H - m1:, :m2]

    if use_pallas:
        m_blk, Mpad, sub, vmem_limit = _plan_mode_blocks(B, Cin, out_channels, Mtot)

        # Pack both corners with the mode axes flattened onto the LAST (lane)
        # axis; re/im stacked on a new leading axis. No transposes needed.
        a = jnp.concatenate([a_top, a_bot], axis=2).reshape(B, Cin, Mtot)
        a = jnp.stack([jnp.real(a), jnp.imag(a)], axis=0).astype(jnp.float32)

        w = packed_weights
        if w is None:
            w = pack_spectral_weights(weights1, weights2)      # (2,Ci,Co,Mtot)

        pad_m = Mpad - Mtot
        a = jnp.pad(a, ((0, 0), (0, 0), (0, 0), (0, pad_m)))
        w = jnp.pad(w, ((0, 0), (0, 0), (0, 0), (0, pad_m)))

        o = _spectral_channel_mix(a, w, m_blk, sub, vmem_limit)  # (2,B,Co,Mpad)

        o_c = (o[0, :, :, :Mtot] + 1j * o[1, :, :, :Mtot]).astype(jnp.complex64)
        o_c = o_c.reshape(B, out_channels, 2 * m1, m2)
        o_top, o_bot = o_c[:, :, :m1, :], o_c[:, :, m1:, :]
    else:
        o_top = jnp.einsum('bixy,ioxy->boxy', a_top, weights1)
        o_bot = jnp.einsum('bixy,ioxy->boxy', a_bot, weights2)

    # Assemble out_ft by pad + concat (no zeros-fill + scatter round-trips).
    pad_w = ((0, 0), (0, 0), (0, 0), (0, Wf - m2))
    top = jnp.pad(o_top.astype(jnp.complex64), pad_w)
    bot = jnp.pad(o_bot.astype(jnp.complex64), pad_w)
    mid = jnp.zeros((B, out_channels, H - 2 * m1, Wf), dtype=jnp.complex64)
    out_ft = jnp.concatenate([top, mid, bot], axis=2)          # (B,Co,H,Wf)

    y = jnp.fft.irfft2(out_ft, s=(H, W))
    return y.astype(jnp.float32)


# ---------------------------------------------------------------------------
# Pure-JAX reference (mirrors the PyTorch module) for a silent sanity check.
# ---------------------------------------------------------------------------
def spectral_conv2d_ref(x, weights1, weights2, modes1, modes2, out_channels):
    B, Cin, H, W = x.shape
    Wf = W // 2 + 1
    x_ft = jnp.fft.rfft2(x)
    out_ft = jnp.zeros((B, out_channels, H, Wf), dtype=jnp.complex64)
    out_ft = out_ft.at[:, :, :modes1, :modes2].set(
        jnp.einsum('bixy,ioxy->boxy', x_ft[:, :, :modes1, :modes2], weights1))
    out_ft = out_ft.at[:, :, -modes1:, :modes2].set(
        jnp.einsum('bixy,ioxy->boxy', x_ft[:, :, -modes1:, :modes2], weights2))
    return jnp.fft.irfft2(out_ft, s=(H, W)).astype(jnp.float32)


def _make_params(key, cin, cout, m1, m2):
    k1, k2, k3, k4 = jax.random.split(key, 4)
    scale = 1.0 / (cin * cout)
    shp = (cin, cout, m1, m2)
    w1 = scale * (jax.random.uniform(k1, shp, dtype=jnp.float32)
                  + 1j * jax.random.uniform(k2, shp, dtype=jnp.float32))
    w2 = scale * (jax.random.uniform(k3, shp, dtype=jnp.float32)
                  + 1j * jax.random.uniform(k4, shp, dtype=jnp.float32))
    return w1.astype(jnp.complex64), w2.astype(jnp.complex64)


if __name__ == "__main__":
    key = jax.random.PRNGKey(0)
    kx1, kw1, kx2, kw2 = jax.random.split(key, 4)

    # --- primary test: small shapes consistent with the module -------------
    B, Cin, Cout = 2, 4, 4
    H = W = 16
    m1 = m2 = 4

    x = jax.random.normal(kx1, (B, Cin, H, W), dtype=jnp.float32)
    w1, w2 = _make_params(kw1, Cin, Cout, m1, m2)

    packed = pack_spectral_weights(w1, w2)          # one-time param pre-pack
    y = spectral_conv2d(x, w1, w2, m1, m2, Cout,
                        packed_weights=packed, use_pallas=True)
    y = jax.block_until_ready(y)
    y_ref = spectral_conv2d_ref(x, w1, w2, m1, m2, Cout)
    assert y.shape == (B, Cout, H, W)
    assert jnp.allclose(y, y_ref, atol=1e-5, rtol=1e-5)

    # --- secondary test: padding + multi-block (>=2) mode grid -------------
    B2, Cin2, Cout2 = 2, 8, 8
    H2 = W2 = 32
    mm1 = mm2 = 12            # Mtot = 288 -> auto Pallas path, grid of 2 blocks

    x2 = jax.random.normal(kx2, (B2, Cin2, H2, W2), dtype=jnp.float32)
    w1b, w2b = _make_params(kw2, Cin2, Cout2, mm1, mm2)

    y2 = spectral_conv2d(x2, w1b, w2b, mm1, mm2, Cout2,
                         packed_weights=pack_spectral_weights(w1b, w2b))
    y2 = jax.block_until_ready(y2)
    y2_ref = spectral_conv2d_ref(x2, w1b, w2b, mm1, mm2, Cout2)
    assert y2.shape == (B2, Cout2, H2, W2)
    assert jnp.allclose(y2, y2_ref, atol=1e-4, rtol=1e-4)

    print("KERNEL_OK")
</pallas_src>

<mosaic_0001>
module attributes {stable_mosaic.version = 11 : i64} {
  func.func @_cmul_kernel(%arg0: i32, %arg1: memref<2x2x4x128xf32, #tpu.memory_space<vmem>>, %arg2: memref<2x4x4x128xf32, #tpu.memory_space<vmem>>, %arg3: memref<2x2x4x128xf32, #tpu.memory_space<vmem>>) attributes {dimension_semantics = [#tpu.dimension_semantics<parallel>], iteration_bounds = array<i64: 1>, scalar_prefetch = 0 : i64, scratch_operands = 0 : i64, tpu.core_type = #tpu.core_type<tc>, window_params = [{transform_indices = @transform_0, window_bounds = array<i64: 2, 2, 4, 128>}, {transform_indices = @transform_1, window_bounds = array<i64: 2, 4, 4, 128>}, {transform_indices = @transform_2, window_bounds = array<i64: 2, 2, 4, 128>}]} {
    %c0 = arith.constant 0 : index
    %c0_0 = arith.constant 0 : index
    %c0_1 = arith.constant 0 : index
    %c0_2 = arith.constant 0 : index
    %0 = vector.load %arg1[%c0, %c0_0, %c0_1, %c0_2] : memref<2x2x4x128xf32, #tpu.memory_space<vmem>>, vector<1x2x4x128xf32>
    %1 = vector.shape_cast %0 : vector<1x2x4x128xf32> to vector<2x4x128xf32>
    %c1 = arith.constant 1 : index
    %c0_3 = arith.constant 0 : index
    %c0_4 = arith.constant 0 : index
    %c0_5 = arith.constant 0 : index
    %2 = vector.load %arg1[%c1, %c0_3, %c0_4, %c0_5] : memref<2x2x4x128xf32, #tpu.memory_space<vmem>>, vector<1x2x4x128xf32>
    %3 = vector.shape_cast %2 : vector<1x2x4x128xf32> to vector<2x4x128xf32>
    %c0_6 = arith.constant 0 : index
    %c0_7 = arith.constant 0 : index
    %c0_8 = arith.constant 0 : index
    %c0_9 = arith.constant 0 : index
    %4 = vector.load %arg2[%c0_6, %c0_7, %c0_8, %c0_9] : memref<2x4x4x128xf32, #tpu.memory_space<vmem>>, vector<1x4x4x128xf32>
    %5 = vector.shape_cast %4 : vector<1x4x4x128xf32> to vector<4x4x128xf32>
    %c1_10 = arith.constant 1 : index
    %c0_11 = arith.constant 0 : index
    %c0_12 = arith.constant 0 : index
    %c0_13 = arith.constant 0 : index
    %6 = vector.load %arg2[%c1_10, %c0_11, %c0_12, %c0_13] : memref<2x4x4x128xf32, #tpu.memory_space<vmem>>, vector<1x4x4x128xf32>
    %7 = vector.shape_cast %6 : vector<1x4x4x128xf32> to vector<4x4x128xf32>
    %cst = arith.constant 0.000000e+00 : f32
    %8 = vector.broadcast %cst : f32 to vector<2x4x128xf32>
    %cst_14 = arith.constant 0.000000e+00 : f32
    %9 = vector.broadcast %cst_14 : f32 to vector<2x4x128xf32>
    %10 = vector.extract_strided_slice %1 {offsets = [0, 0, 0], sizes = [2, 1, 128], strides = [1, 1, 1]} : vector<2x4x128xf32> to vector<2x1x128xf32>
    %11 = vector.extract_strided_slice %3 {offsets = [0, 0, 0], sizes = [2, 1, 128], strides = [1, 1, 1]} : vector<2x4x128xf32> to vector<2x1x128xf32>
    %12 = vector.extract_strided_slice %5 {offsets = [0, 0, 0], sizes = [1, 4, 128], strides = [1, 1, 1]} : vector<4x4x128xf32> to vector<1x4x128xf32>
    %13 = vector.extract_strided_slice %7 {offsets = [0, 0, 0], sizes = [1, 4, 128], strides = [1, 1, 1]} : vector<4x4x128xf32> to vector<1x4x128xf32>
    %14 = vector.broadcast %10 : vector<2x1x128xf32> to vector<2x4x128xf32>
    %15 = vector.broadcast %12 : vector<1x4x128xf32> to vector<2x4x128xf32>
    %16 = arith.mulf %14, %15 : vector<2x4x128xf32>
    %17 = arith.addf %8, %16 : vector<2x4x128xf32>
    %18 = vector.broadcast %11 : vector<2x1x128xf32> to vector<2x4x128xf32>
    %19 = vector.broadcast %13 : vector<1x4x128xf32> to vector<2x4x128xf32>
    %20 = arith.mulf %18, %19 : vector<2x4x128xf32>
    %21 = arith.subf %17, %20 : vector<2x4x128xf32>
    %22 = vector.broadcast %10 : vector<2x1x128xf32> to vector<2x4x128xf32>
    %23 = vector.broadcast %13 : vector<1x4x128xf32> to vector<2x4x128xf32>
    %24 = arith.mulf %22, %23 : vector<2x4x128xf32>
    %25 = arith.addf %9, %24 : vector<2x4x128xf32>
    %26 = vector.broadcast %11 : vector<2x1x128xf32> to vector<2x4x128xf32>
    %27 = vector.broadcast %12 : vector<1x4x128xf32> to vector<2x4x128xf32>
    %28 = arith.mulf %26, %27 : vector<2x4x128xf32>
    %29 = arith.addf %25, %28 : vector<2x4x128xf32>
    %30 = vector.extract_strided_slice %1 {offsets = [0, 1, 0], sizes = [2, 1, 128], strides = [1, 1, 1]} : vector<2x4x128xf32> to vector<2x1x128xf32>
    %31 = vector.extract_strided_slice %3 {offsets = [0, 1, 0], sizes = [2, 1, 128], strides = [1, 1, 1]} : vector<2x4x128xf32> to vector<2x1x128xf32>
    %32 = vector.extract_strided_slice %5 {offsets = [1, 0, 0], sizes = [1, 4, 128], strides = [1, 1, 1]} : vector<4x4x128xf32> to vector<1x4x128xf32>
    %33 = vector.extract_strided_slice %7 {offsets = [1, 0, 0], sizes = [1, 4, 128], strides = [1, 1, 1]} : vector<4x4x128xf32> to vector<1x4x128xf32>
    %34 = vector.broadcast %30 : vector<2x1x128xf32> to vector<2x4x128xf32>
    %35 = vector.broadcast %32 : vector<1x4x128xf32> to vector<2x4x128xf32>
    %36 = arith.mulf %34, %35 : vector<2x4x128xf32>
    %37 = arith.addf %21, %36 : vector<2x4x128xf32>
    %38 = vector.broadcast %31 : vector<2x1x128xf32> to vector<2x4x128xf32>
    %39 = vector.broadcast %33 : vector<1x4x128xf32> to vector<2x4x128xf32>
    %40 = arith.mulf %38, %39 : vector<2x4x128xf32>
    %41 = arith.subf %37, %40 : vector<2x4x128xf32>
    %42 = vector.broadcast %30 : vector<2x1x128xf32> to vector<2x4x128xf32>
    %43 = vector.broadcast %33 : vector<1x4x128xf32> to vector<2x4x128xf32>
    %44 = arith.mulf %42, %43 : vector<2x4x128xf32>
    %45 = arith.addf %29, %44 : vector<2x4x128xf32>
    %46 = vector.broadcast %31 : vector<2x1x128xf32> to vector<2x4x128xf32>
    %47 = vector.broadcast %32 : vector<1x4x128xf32> to vector<2x4x128xf32>
    %48 = arith.mulf %46, %47 : vector<2x4x128xf32>
    %49 = arith.addf %45, %48 : vector<2x4x128xf32>
    %50 = vector.extract_strided_slice %1 {offsets = [0, 2, 0], sizes = [2, 1, 128], strides = [1, 1, 1]} : vector<2x4x128xf32> to vector<2x1x128xf32>
    %51 = vector.extract_strided_slice %3 {offsets = [0, 2, 0], sizes = [2, 1, 128], strides = [1, 1, 1]} : vector<2x4x128xf32> to vector<2x1x128xf32>
    %52 = vector.extract_strided_slice %5 {offsets = [2, 0, 0], sizes = [1, 4, 128], strides = [1, 1, 1]} : vector<4x4x128xf32> to vector<1x4x128xf32>
    %53 = vector.extract_strided_slice %7 {offsets = [2, 0, 0], sizes = [1, 4, 128], strides = [1, 1, 1]} : vector<4x4x128xf32> to vector<1x4x128xf32>
    %54 = vector.broadcast %50 : vector<2x1x128xf32> to vector<2x4x128xf32>
    %55 = vector.broadcast %52 : vector<1x4x128xf32> to vector<2x4x128xf32>
    %56 = arith.mulf %54, %55 : vector<2x4x128xf32>
    %57 = arith.addf %41, %56 : vector<2x4x128xf32>
    %58 = vector.broadcast %51 : vector<2x1x128xf32> to vector<2x4x128xf32>
    %59 = vector.broadcast %53 : vector<1x4x128xf32> to vector<2x4x128xf32>
    %60 = arith.mulf %58, %59 : vector<2x4x128xf32>
    %61 = arith.subf %57, %60 : vector<2x4x128xf32>
    %62 = vector.broadcast %50 : vector<2x1x128xf32> to vector<2x4x128xf32>
    %63 = vector.broadcast %53 : vector<1x4x128xf32> to vector<2x4x128xf32>
    %64 = arith.mulf %62, %63 : vector<2x4x128xf32>
    %65 = arith.addf %49, %64 : vector<2x4x128xf32>
    %66 = vector.broadcast %51 : vector<2x1x128xf32> to vector<2x4x128xf32>
    %67 = vector.broadcast %52 : vector<1x4x128xf32> to vector<2x4x128xf32>
    %68 = arith.mulf %66, %67 : vector<2x4x128xf32>
    %69 = arith.addf %65, %68 : vector<2x4x128xf32>
    %70 = vector.extract_strided_slice %1 {offsets = [0, 3, 0], sizes = [2, 1, 128], strides = [1, 1, 1]} : vector<2x4x128xf32> to vector<2x1x128xf32>
    %71 = vector.extract_strided_slice %3 {offsets = [0, 3, 0], sizes = [2, 1, 128], strides = [1, 1, 1]} : vector<2x4x128xf32> to vector<2x1x128xf32>
    %72 = vector.extract_strided_slice %5 {offsets = [3, 0, 0], sizes = [1, 4, 128], strides = [1, 1, 1]} : vector<4x4x128xf32> to vector<1x4x128xf32>
    %73 = vector.extract_strided_slice %7 {offsets = [3, 0, 0], sizes = [1, 4, 128], strides = [1, 1, 1]} : vector<4x4x128xf32> to vector<1x4x128xf32>
    %74 = vector.broadcast %70 : vector<2x1x128xf32> to vector<2x4x128xf32>
    %75 = vector.broadcast %72 : vector<1x4x128xf32> to vector<2x4x128xf32>
    %76 = arith.mulf %74, %75 : vector<2x4x128xf32>
    %77 = arith.addf %61, %76 : vector<2x4x128xf32>
    %78 = vector.broadcast %71 : vector<2x1x128xf32> to vector<2x4x128xf32>
    %79 = vector.broadcast %73 : vector<1x4x128xf32> to vector<2x4x128xf32>
    %80 = arith.mulf %78, %79 : vector<2x4x128xf32>
    %81 = arith.subf %77, %80 : vector<2x4x128xf32>
    %82 = vector.broadcast %70 : vector<2x1x128xf32> to vector<2x4x128xf32>
    %83 = vector.broadcast %73 : vector<1x4x128xf32> to vector<2x4x128xf32>
    %84 = arith.mulf %82, %83 : vector<2x4x128xf32>
    %85 = arith.addf %69, %84 : vector<2x4x128xf32>
    %86 = vector.broadcast %71 : vector<2x1x128xf32> to vector<2x4x128xf32>
    %87 = vector.broadcast %72 : vector<1x4x128xf32> to vector<2x4x128xf32>
    %88 = arith.mulf %86, %87 : vector<2x4x128xf32>
    %89 = arith.addf %85, %88 : vector<2x4x128xf32>
    %c0_15 = arith.constant 0 : index
    %c0_16 = arith.constant 0 : index
    %c0_17 = arith.constant 0 : index
    %c0_18 = arith.constant 0 : index
    %90 = vector.load %arg3[%c0_15, %c0_16, %c0_17, %c0_18] : memref<2x2x4x128xf32, #tpu.memory_space<vmem>>, vector<1x2x4x128xf32>
    %91 = vector.shape_cast %90 : vector<1x2x4x128xf32> to vector<2x4x128xf32>
    %92 = vector.shape_cast %81 : vector<2x4x128xf32> to vector<1x2x4x128xf32>
    tpu.vector_store %arg3[%c0_15, %c0_16, %c0_17, %c0_18], %92 {strides = array<i32>} : memref<2x2x4x128xf32, #tpu.memory_space<vmem>>, vector<1x2x4x128xf32>,
    %c1_19 = arith.constant 1 : index
    %c0_20 = arith.constant 0 : index
    %c0_21 = arith.constant 0 : index
    %c0_22 = arith.constant 0 : index
    %93 = vector.load %arg3[%c1_19, %c0_20, %c0_21, %c0_22] : memref<2x2x4x128xf32, #tpu.memory_space<vmem>>, vector<1x2x4x128xf32>
    %94 = vector.shape_cast %93 : vector<1x2x4x128xf32> to vector<2x4x128xf32>
    %95 = vector.shape_cast %89 : vector<2x4x128xf32> to vector<1x2x4x128xf32>
    tpu.vector_store %arg3[%c1_19, %c0_20, %c0_21, %c0_22], %95 {strides = array<i32>} : memref<2x2x4x128xf32, #tpu.memory_space<vmem>>, vector<1x2x4x128xf32>,
    return
  }
  func.func @transform_0(%arg0: i32) -> (i32, i32, i32, i32) {
    %c0_i32 = arith.constant 0 : i32
    %c0_i32_0 = arith.constant 0 : i32
    %c0_i32_1 = arith.constant 0 : i32
    %c0_i32_2 = arith.constant 0 : i32
    return %c0_i32, %c0_i32_0, %c0_i32_1, %arg0 : i32, i32, i32, i32
  }
  func.func @transform_1(%arg0: i32) -> (i32, i32, i32, i32) {
    %c0_i32 = arith.constant 0 : i32
    %c0_i32_0 = arith.constant 0 : i32
    %c0_i32_1 = arith.constant 0 : i32
    %c0_i32_2 = arith.constant 0 : i32
    return %c0_i32, %c0_i32_0, %c0_i32_1, %arg0 : i32, i32, i32, i32
  }
  func.func @transform_2(%arg0: i32) -> (i32, i32, i32, i32) {
    %c0_i32 = arith.constant 0 : i32
    %c0_i32_0 = arith.constant 0 : i32
    %c0_i32_1 = arith.constant 0 : i32
    %c0_i32_2 = arith.constant 0 : i32
    return %c0_i32, %c0_i32_0, %c0_i32_1, %arg0 : i32, i32, i32, i32
  }
}

</mosaic_0001>

<llo_original>
// kernel: tpu_custom_call.1
$region0: #{tpu_custom_call.1}
  #allocation0 [shape = 'u32[]', space=smem, size = 0x4, offset = 0x4, fixed_abs, tag = 'smem constant byte address 0x4 - core index']
  #allocation1 [shape = 'u32[144,128]{1,0:T(1,128)}', space=vmem, size = 0x12000, scoped, tag = 'internal scratch']
  %s0 = inlined_call_operand.hbm [shape: f32[2,2,4,128], index: 0, kind: input, shape index: {}]
  %s1 = inlined_call_operand.hbm [shape: f32[2,4,4,128], index: 1, kind: input, shape index: {}]
  %s2 = inlined_call_operand.hbm [shape: f32[2,2,4,128], index: 2, kind: output, shape index: {}]
  %s3 = sld [smem:[#allocation0]]
  $region26: #{tpu_custom_call.1} parent=0
    _
  %s5 = ssub.s32 1, %s3
  %s6 = scalar_select 0, %s5, %s3
  $region1: #{tpu_custom_call.1} parent=0
    #allocation2 [shape = 'u8[8192]{0}', space=vmem, size = 0x2000, scoped, tag = 'input window, operand 0, single buffered']
    #allocation3 [shape = 's32[1]{0}', space=sflag, size = 0x4, scoped, tag = 'scoped memory for tpu_custom_call.1']
    #allocation4 [shape = 's32[1]{0}', space=sflag, size = 0x4, scoped, tag = 'scoped memory for tpu_custom_call.1']
    #allocation5 [shape = 'u8[16384]{0}', space=vmem, size = 0x4000, scoped, tag = 'input window, operand 1, single buffered']
    #allocation6 [shape = 's32[1]{0}', space=sflag, size = 0x4, scoped, tag = 'scoped memory for tpu_custom_call.1']
    #allocation7 [shape = 'u8[8192]{0}', space=vmem, size = 0x2000, scoped, tag = 'output window, operand 0, single buffered']
    %7 = vsyncpa [#allocation3], 0
    %8 = vsyncpa [#allocation6], 0
    %9 = vsyncpa [#allocation4], 0
    // Predicated region
    $region2: #{tpu_custom_call.1} parent=1 // pred_check
      _
    $region3: #{tpu_custom_call.1} parent=1 // pred_check_branch
      %11 = sbr.rel (0) target = $region5
    $region4: #{tpu_custom_call.1} parent=1 // pred_region
      %s13 = ssub.s32 256, 256
      %14 = vsyncadd [#allocation3], %s13
      %s15 = sshll.u32 [#allocation2], 4
      %s16 = int_to_ptr.vmem [resolvable:$true] %s15
      %21 = dma.hbm_to_vmem [thread:$0]  %s0, 256, %s16, [#allocation3], 64, 64, 4
    $region5: #{tpu_custom_call.1} parent=1 // pred_fallthru
      _
    // Predicated region
    $region6: #{tpu_custom_call.1} parent=1 // pred_check
      _
    $region7: #{tpu_custom_call.1} parent=1 // pred_check_branch
      %23 = sbr.rel (0) target = $region9
    $region8: #{tpu_custom_call.1} parent=1 // pred_region
      %s25 = ssub.s32 512, 512
      %26 = vsyncadd [#allocation6], %s25
      %s27 = sshll.u32 [#allocation5], 4
      %s28 = int_to_ptr.vmem [resolvable:$true] %s27
      %33 = dma.hbm_to_vmem [thread:$0]  %s1, 512, %s28, [#allocation6], 64, 64, 4
    $region9: #{tpu_custom_call.1} parent=1 // pred_fallthru
      _
    // Predicated region
    $region10: #{tpu_custom_call.1} parent=1 // pred_check
      _
    $region11: #{tpu_custom_call.1} parent=1 // pred_check_branch
      %35 = sbr.rel (0) target = $region13
    $region12: #{tpu_custom_call.1} parent=1 // pred_region
      %36 = dma.done [#allocation3], 256
    $region13: #{tpu_custom_call.1} parent=1 // pred_fallthru
      _
    // Predicated region
    $region14: #{tpu_custom_call.1} parent=1 // pred_check
      _
    $region15: #{tpu_custom_call.1} parent=1 // pred_check_branch
      %38 = sbr.rel (0) target = $region17
    $region16: #{tpu_custom_call.1} parent=1 // pred_region
      %39 = dma.done [#allocation6], 512
    $region17: #{tpu_custom_call.1} parent=1 // pred_fallthru
      _
    %v40 = vld [vmem:[#allocation2] sm:$0xf]
    %v41 = vld [vmem:[#allocation2 + $0x4] sm:$0xf]
    %s42 = scalar_lea.vmem [#allocation2], 8
    %v43 = vld [vmem:[%s42] sm:$0xf]
    %v44 = vld [vmem:[%s42 + $0x4] sm:$0xf]
    %v45 = vld [vmem:[#allocation5] sm:$0xf]
    %v46 = vld [vmem:[#allocation5 + $0x4] sm:$0xf]
    %v47 = vld [vmem:[#allocation5 + $0x8] sm:$0xf]
    %v48 = vld [vmem:[#allocation5 + $0xc] sm:$0xf]
    %s49 = scalar_lea.vmem [#allocation5], 16
    %v50 = vld [vmem:[%s49] sm:$0xf]
    %v51 = vld [vmem:[%s49 + $0x4] sm:$0xf]
    %v52 = vld [vmem:[%s49 + $0x8] sm:$0xf]
    %v53 = vld [vmem:[%s49 + $0xc] sm:$0xf]
    %v54 = vlaneseq
    %v55 = vshrl.u32 %v54, 7
    %v56 = vsub.s32 0, %v55
    %v57 = vrot.slane %v40, %v56
    %v58 = vlaneseq
    %v59 = vshrl.u32 %v58, 7
    %v60 = vsub.s32 0, %v59
    %v61 = vrot.slane %v41, %v60
    %v62 = vmul.f32 %v57, %v45
    %v63 = vmul.f32 %v61, %v45
    %v64 = vadd.f32 %v62, 0.0
    %v65 = vadd.f32 %v63, 0.0
    %v66 = vlaneseq
    %v67 = vshrl.u32 %v66, 7
    %v68 = vsub.s32 0, %v67
    %v69 = vrot.slane %v43, %v68
    %v70 = vlaneseq
    %v71 = vshrl.u32 %v70, 7
    %v72 = vsub.s32 0, %v71
    %v73 = vrot.slane %v44, %v72
    %v74 = vmul.f32 %v69, %v50
    %v75 = vmul.f32 %v73, %v50
    %v76 = vsub.f32 %v64, %v74
    %v77 = vsub.f32 %v65, %v75
    %v78 = vmul.f32 %v57, %v50
    %v79 = vmul.f32 %v61, %v50
    %v80 = vadd.f32 %v78, 0.0
    %v81 = vadd.f32 %v79, 0.0
    %v82 = vmul.f32 %v69, %v45
    %v83 = vmul.f32 %v73, %v45
    %v84 = vadd.f32 %v80, %v82
    %v85 = vadd.f32 %v81, %v83
    %v86 = vlaneseq
    %v87 = vshrl.u32 %v86, 7
    %v88 = vsub.s32 1, %v87
    %v89 = vrot.slane %v40, %v88
    %v90 = vlaneseq
    %v91 = vshrl.u32 %v90, 7
    %v92 = vsub.s32 1, %v91
    %v93 = vrot.slane %v41, %v92
    %v94 = vmul.f32 %v89, %v46
    %v95 = vmul.f32 %v93, %v46
    %v96 = vadd.f32 %v76, %v94
    %v97 = vadd.f32 %v77, %v95
    %v98 = vlaneseq
    %v99 = vshrl.u32 %v98, 7
    %v100 = vsub.s32 1, %v99
    %v101 = vrot.slane %v43, %v100
    %v102 = vlaneseq
    %v103 = vshrl.u32 %v102, 7
    %v104 = vsub.s32 1, %v103
    %v105 = vrot.slane %v44, %v104
    %v106 = vmul.f32 %v101, %v51
    %v107 = vmul.f32 %v105, %v51
    %v108 = vsub.f32 %v96, %v106
    %v109 = vsub.f32 %v97, %v107
    %v110 = vmul.f32 %v89, %v51
    %v111 = vmul.f32 %v93, %v51
    %v112 = vadd.f32 %v84, %v110
    %v113 = vadd.f32 %v85, %v111
    %v114 = vmul.f32 %v101, %v46
    %v115 = vmul.f32 %v105, %v46
    %v116 = vadd.f32 %v112, %v114
    %v117 = vadd.f32 %v113, %v115
    %v118 = vlaneseq
    %v119 = vshrl.u32 %v118, 7
    %v120 = vsub.s32 2, %v119
    %v121 = vrot.slane %v40, %v120
    %v122 = vlaneseq
    %v123 = vshrl.u32 %v122, 7
    %v124 = vsub.s32 2, %v123
    %v125 = vrot.slane %v41, %v124
    %v126 = vmul.f32 %v121, %v47
    %v127 = vmul.f32 %v125, %v47
    %v128 = vadd.f32 %v108, %v126
    %v129 = vadd.f32 %v109, %v127
    %v130 = vlaneseq
    %v131 = vshrl.u32 %v130, 7
    %v132 = vsub.s32 2, %v131
    %v133 = vrot.slane %v43, %v132
    %v134 = vlaneseq
    %v135 = vshrl.u32 %v134, 7
    %v136 = vsub.s32 2, %v135
    %v137 = vrot.slane %v44, %v136
    %v138 = vmul.f32 %v133, %v52
    %v139 = vmul.f32 %v137, %v52
    %v140 = vsub.f32 %v128, %v138
    %v141 = vsub.f32 %v129, %v139
    %v142 = vmul.f32 %v121, %v52
    %v143 = vmul.f32 %v125, %v52
    %v144 = vadd.f32 %v116, %v142
    %v145 = vadd.f32 %v117, %v143
    %v146 = vmul.f32 %v133, %v47
    %v147 = vmul.f32 %v137, %v47
    %v148 = vadd.f32 %v144, %v146
    %v149 = vadd.f32 %v145, %v147
    %v150 = vlaneseq
    %v151 = vshrl.u32 %v150, 7
    %v152 = vsub.s32 3, %v151
    %v153 = vrot.slane %v40, %v152
    %v154 = vlaneseq
    %v155 = vshrl.u32 %v154, 7
    %v156 = vsub.s32 3, %v155
    %v157 = vrot.slane %v41, %v156
    %v158 = vmul.f32 %v153, %v48
    %v159 = vmul.f32 %v157, %v48
    %v160 = vadd.f32 %v140, %v158
    %v161 = vadd.f32 %v141, %v159
    %v162 = vlaneseq
    %v163 = vshrl.u32 %v162, 7
    %v164 = vsub.s32 3, %v163
    %v165 = vrot.slane %v43, %v164
    %v166 = vlaneseq
    %v167 = vshrl.u32 %v166, 7
    %v168 = vsub.s32 3, %v167
    %v169 = vrot.slane %v44, %v168
    %v170 = vmul.f32 %v165, %v53
    %v171 = vmul.f32 %v169, %v53
    %v172 = vsub.f32 %v160, %v170
    %v173 = vsub.f32 %v161, %v171
    %v174 = vmul.f32 %v153, %v53
    %v175 = vmul.f32 %v157, %v53
    %v176 = vadd.f32 %v148, %v174
    %v177 = vadd.f32 %v149, %v175
    %v178 = vmul.f32 %v165, %v48
    %v179 = vmul.f32 %v169, %v48
    %v180 = vadd.f32 %v176, %v178
    %v181 = vadd.f32 %v177, %v179
    %182 = vst [vmem:[#allocation7] sm:$0xf] %v172
    %183 = vst [vmem:[#allocation7 + $0x4] sm:$0xf] %v173
    %s184 = scalar_lea.vmem [#allocation7], 8
    %185 = vst [vmem:[%s184] sm:$0xf] %v180
    %186 = vst [vmem:[%s184 + $0x4] sm:$0xf] %v181
    // Predicated region
    $region18: #{tpu_custom_call.1} parent=1 // pred_check
      _
    $region19: #{tpu_custom_call.1} parent=1 // pred_check_branch
      %188 = sbr.rel (0) target = $region21
    $region20: #{tpu_custom_call.1} parent=1 // pred_region
      %s190 = ssub.s32 256, 256
      %191 = vsyncadd [#allocation4], %s190
      %s192 = sshll.u32 [#allocation7], 4
      %s193 = int_to_ptr.vmem [resolvable:$true] %s192
      %198 = dma.vmem_to_hbm [thread:$0]  %s193, 256, %s2, [#allocation4], 64, 64, 4
    $region21: #{tpu_custom_call.1} parent=1 // pred_fallthru
      _
    // Predicated region
    $region22: #{tpu_custom_call.1} parent=1 // pred_check
      _
    $region23: #{tpu_custom_call.1} parent=1 // pred_check_branch
      %200 = sbr.rel (0) target = $region25
    $region24: #{tpu_custom_call.1} parent=1 // pred_region
      %201 = dma.done [#allocation4], 256
    $region25: #{tpu_custom_call.1} parent=1 // pred_fallthru
      _
    %202 = vsyncpa [#allocation3], 1
    %203 = vsyncpa [#allocation6], 1
    %204 = vsyncpa [#allocation4], 1

</llo_original>
